<compile_context>
chip_gen: v7x
topology: tpu7x:2x2x1
jax: 0.10.0
libtpu: 0.0.40
codegen_flags: <defaults>
</compile_context>

<pallas_src>
import jax
import jax.numpy as jnp
from jax.experimental import pallas as pl
from jax.experimental.pallas import tpu as pltpu


# --------------------------------------------------------------------------- #
# Hardware-aware sizing helpers
# --------------------------------------------------------------------------- #
def _vmem_capacity_bytes():
    try:
        return int(pltpu.get_tpu_info().vmem_capacity_bytes)
    except Exception:
        return 64 << 20  # conservative default (v7x per-TC VMEM)


def _vmem_budget_bytes():
    # Double-buffered working-set cap: ~24 MiB on v7x (64 MiB VMEM),
    # ~48 MiB on v5e/v6e (128 MiB VMEM).
    return (_vmem_capacity_bytes() * 3) // 8


def _vmem_limit_bytes():
    # Scoped-VMEM limit handed to Mosaic: ~40 MiB on v7x, ~80 MiB on v5e/v6e.
    return int((_vmem_capacity_bytes() * 5) // 8)


def choose_tile_e(embed_dim, cond_dim, batch, w_itemsize, out_itemsize,
                  x_itemsize=4, budget_bytes=None):
    """Largest tile of embed_dim (divisor, multiple of 128) fitting the VMEM budget."""
    if budget_bytes is None:
        budget_bytes = _vmem_budget_bytes()
    if embed_dim % 128 != 0:
        # Non-128-multiple widths are only legal as a full-extent block.
        return embed_dim
    candidates = sorted(
        (d for d in range(128, embed_dim + 1, 128) if embed_dim % d == 0),
        reverse=True,
    )
    for cand in candidates:
        working = (
            2 * cond_dim * cand * w_itemsize      # weight tile, double-buffered
            + 2 * batch * cand * out_itemsize     # output tile, double-buffered
            + 2 * cand * 4                        # f32 bias tile, double-buffered
            + 2 * batch * cond_dim * x_itemsize   # resident conditioning (2x: safe)
        )
        if working <= budget_bytes:
            return cand
    return 128


# --------------------------------------------------------------------------- #
# Parameter packing (one-time re-layout, like storing the nn.Linear weight)
# --------------------------------------------------------------------------- #
def pack_params(weight, bias, *, num_chunks=6, tile_e=None, weight_dtype=None,
                batch_hint=64, out_dtype_hint=jnp.float32):
    """Re-layout nn.Linear params for the kernel.

    weight: (6*embed_dim, cond_dim)   PyTorch nn.Linear layout
    bias:   (6*embed_dim,)
    Returns:
      weight_t: (6*n_tiles, cond_dim, tile_e)  -- each weight tile contiguous in HBM
      bias_c:   (6, 1, embed_dim)  float32     -- bias kept in f32 (tiny, exact)
    Optionally down-casts the weight (e.g. bf16) to halve weight streaming.
    """
    out_dim, cond_dim = weight.shape
    assert out_dim % num_chunks == 0
    embed_dim = out_dim // num_chunks

    w_dt = jnp.dtype(weight_dtype) if weight_dtype is not None else jnp.dtype(weight.dtype)
    if tile_e is None:
        tile_e = choose_tile_e(embed_dim, cond_dim, batch_hint,
                               w_dt.itemsize, jnp.dtype(out_dtype_hint).itemsize)
    assert embed_dim % tile_e == 0
    n_tiles = embed_dim // tile_e

    w = weight.astype(w_dt)
    # (6E, C) -> (6, E, C) -> (6, C, E) -> (6, C, nt, te) -> (6, nt, C, te) -> (6*nt, C, te)
    w = w.reshape(num_chunks, embed_dim, cond_dim).transpose(0, 2, 1)
    w = w.reshape(num_chunks, cond_dim, n_tiles, tile_e).transpose(0, 2, 1, 3)
    weight_t = w.reshape(num_chunks * n_tiles, cond_dim, tile_e)

    bias_c = bias.astype(jnp.float32).reshape(num_chunks, 1, embed_dim)
    return weight_t, bias_c


# --------------------------------------------------------------------------- #
# Kernel
# --------------------------------------------------------------------------- #
def _scale_shift_kernel(x_ref, w_ref, b_ref, o_ref):
    # x: (B, cond_dim)  w: (cond_dim, tile_e)  b: (1, tile_e) f32  o: (B, tile_e)
    acc = jnp.dot(x_ref[...], w_ref[...], preferred_element_type=jnp.float32)
    o_ref[...] = (acc + b_ref[...]).astype(o_ref.dtype)


def make_scale_shift(conditioning, weight_t, bias_c, *, out_dtype=None):
    """MakeScaleShift forward.

    conditioning: (B, cond_dim)
    weight_t:     (6*n_tiles, cond_dim, tile_e)   from pack_params()
    bias_c:       (6, 1, embed_dim) float32       from pack_params()
    Returns a 6-tuple of (B, embed_dim) arrays == Linear(...).chunk(6, dim=-1).
    """
    B, cond_dim = conditioning.shape
    G, cd2, tile_e = weight_t.shape
    assert cd2 == cond_dim and G % 6 == 0
    n_tiles = G // 6
    embed_dim = n_tiles * tile_e
    assert bias_c.shape == (6, 1, embed_dim)

    if out_dtype is None:
        out_dtype = conditioning.dtype

    # Keep both MXU operands in the (streamed) weight dtype; accumulate in f32.
    x = conditioning if conditioning.dtype == weight_t.dtype \
        else conditioning.astype(weight_t.dtype)

    cost = pl.CostEstimate(
        flops=2 * B * cond_dim * 6 * embed_dim,
        transcendentals=0,
        bytes_accessed=(
            x.size * x.dtype.itemsize
            + weight_t.size * weight_t.dtype.itemsize
            + bias_c.size * bias_c.dtype.itemsize
            + 6 * B * embed_dim * jnp.dtype(out_dtype).itemsize
        ),
    )

    fused = pl.pallas_call(
        _scale_shift_kernel,
        out_shape=jax.ShapeDtypeStruct((6, B, embed_dim), out_dtype),
        grid_spec=pltpu.PrefetchScalarGridSpec(
            num_scalar_prefetch=0,
            grid=(6, n_tiles),
            in_specs=[
                # conditioning: same block every step -> fetched once, resident.
                pl.BlockSpec((B, cond_dim), lambda c, j: (0, 0)),
                # weight tile: flat leading block index -> one contiguous DMA.
                pl.BlockSpec((None, cond_dim, tile_e),
                             lambda c, j: (c * n_tiles + j, 0, 0)),
                # f32 bias tile.
                pl.BlockSpec((None, 1, tile_e), lambda c, j: (c, 0, j)),
            ],
            out_specs=pl.BlockSpec((None, B, tile_e), lambda c, j: (c, 0, j)),
        ),
        compiler_params=pltpu.CompilerParams(
            dimension_semantics=("parallel", "parallel"),
            vmem_limit_bytes=_vmem_limit_bytes(),
        ),
        cost_estimate=cost,
    )(x, weight_t, bias_c)

    # chunk(6, dim=-1) is free: output is already chunk-major on the leading axis.
    # (Callers that consume all six chunks may prefer to take `fused` directly and
    #  index it, so XLA never materializes separate copies.)
    return tuple(fused[c] for c in range(6))


# --------------------------------------------------------------------------- #
# Self-test
# --------------------------------------------------------------------------- #
if __name__ == "__main__":
    key = jax.random.PRNGKey(0)
    k_x, k_w, k_b, k_x2, k_w2, k_b2 = jax.random.split(key, 6)

    # ---- Test 1: module at init (zero weight/bias), small shapes ------------
    B, cond_dim, embed_dim = 2, 32, 32
    conditioning = jax.random.normal(k_x, (B, cond_dim), dtype=jnp.float32)
    w0 = jnp.zeros((6 * embed_dim, cond_dim), dtype=jnp.float32)  # nn.Linear layout
    b0 = jnp.zeros((6 * embed_dim,), dtype=jnp.float32)
    wt0, bc0 = pack_params(w0, b0)
    outs = jax.block_until_ready(make_scale_shift(conditioning, wt0, bc0))
    assert len(outs) == 6 and all(o.shape == (B, embed_dim) for o in outs)
    assert all(bool(jnp.all(o == 0.0)) for o in outs)

    # ---- Test 2: random f32 params, non-128 embed_dim (full-block path) -----
    w_r = jax.random.normal(k_w, (6 * embed_dim, cond_dim), dtype=jnp.float32) * 0.02
    b_r = jax.random.normal(k_b, (6 * embed_dim,), dtype=jnp.float32) * 0.02
    wt_r, bc_r = pack_params(w_r, b_r)
    outs_r = jax.block_until_ready(make_scale_shift(conditioning, wt_r, bc_r))
    ref = conditioning @ w_r.T + b_r[None, :]
    for i, got in enumerate(outs_r):
        want = ref[:, i * embed_dim:(i + 1) * embed_dim]
        assert jnp.allclose(got, want, atol=1e-5, rtol=1e-5)

    # ---- Test 3: explicitly tiled path (grid=(6, 2), contiguous tiles) ------
    B2, cond_dim2, embed_dim2 = 8, 64, 256
    x2 = jax.random.normal(k_x2, (B2, cond_dim2), dtype=jnp.float32)
    w2 = jax.random.normal(k_w2, (6 * embed_dim2, cond_dim2), dtype=jnp.float32) * 0.02
    b2 = jax.random.normal(k_b2, (6 * embed_dim2,), dtype=jnp.float32) * 0.02
    wt2, bc2 = pack_params(w2, b2, tile_e=128)
    outs2 = jax.block_until_ready(make_scale_shift(x2, wt2, bc2))
    ref2 = x2 @ w2.T + b2[None, :]
    for i, got in enumerate(outs2):
        want = ref2[:, i * embed_dim2:(i + 1) * embed_dim2]
        assert jnp.allclose(got, want, atol=1e-5, rtol=1e-5)

    # ---- Test 4: auto tile picker (divisor-based) picks full-width tile -----
    wt2a, bc2a = pack_params(w2, b2, batch_hint=B2)
    assert wt2a.shape[0] == 6 and wt2a.shape[2] == embed_dim2  # one tile per chunk
    outs2a = jax.block_until_ready(make_scale_shift(x2, wt2a, bc2a))
    for i, got in enumerate(outs2a):
        want = ref2[:, i * embed_dim2:(i + 1) * embed_dim2]
        assert jnp.allclose(got, want, atol=1e-5, rtol=1e-5)

    # ---- Test 5: production path: bf16 weight streaming, f32 bias -----------
    # Mixed-precision note: bf16 x bf16 MXU with f32 accumulation is not
    # bit-identical to a pure-f32 PyTorch Linear; expected rel. error ~1e-2.
    wt2_bf, bc2_bf = pack_params(w2, b2, weight_dtype=jnp.bfloat16, batch_hint=B2)
    assert bc2_bf.dtype == jnp.float32  # bias stays f32
    outs2_bf = jax.block_until_ready(make_scale_shift(x2, wt2_bf, bc2_bf))
    for i, got in enumerate(outs2_bf):
        want = ref2[:, i * embed_dim2:(i + 1) * embed_dim2]
        assert jnp.allclose(got, want, atol=3e-2, rtol=3e-2)

    print("KERNEL_OK")
</pallas_src>

<mosaic_0001>
module attributes {stable_mosaic.version = 11 : i64} {
  func.func @_scale_shift_kernel(%arg0: i32, %arg1: i32, %arg2: memref<2x32xf32, #tpu.memory_space<vmem>>, %arg3: memref<1x32x32xf32, #tpu.memory_space<vmem>>, %arg4: memref<1x1x32xf32, #tpu.memory_space<vmem>>, %arg5: memref<1x2x32xf32, #tpu.memory_space<vmem>>) attributes {dimension_semantics = [#tpu.dimension_semantics<parallel>, #tpu.dimension_semantics<parallel>], iteration_bounds = array<i64: 6, 1>, scalar_prefetch = 0 : i64, scratch_operands = 0 : i64, tpu.core_type = #tpu.core_type<tc>, window_params = [{pipeline_mode = #tpu.pipeline_mode<synchronous>, transform_indices = @transform_0, window_bounds = array<i64: 2, 32>}, {transform_indices = @transform_1, window_bounds = array<i64: 1, 32, 32>}, {transform_indices = @transform_2, window_bounds = array<i64: 1, 1, 32>}, {transform_indices = @transform_3, window_bounds = array<i64: 1, 2, 32>}]} {
    %c0 = arith.constant 0 : index
    %c0_0 = arith.constant 0 : index
    %0 = vector.load %arg2[%c0, %c0_0] : memref<2x32xf32, #tpu.memory_space<vmem>>, vector<2x32xf32>
    %c0_1 = arith.constant 0 : index
    %c0_2 = arith.constant 0 : index
    %c0_3 = arith.constant 0 : index
    %1 = vector.load %arg3[%c0_1, %c0_2, %c0_3] : memref<1x32x32xf32, #tpu.memory_space<vmem>>, vector<1x32x32xf32>
    %2 = vector.shape_cast %1 : vector<1x32x32xf32> to vector<32x32xf32>
    %cst = arith.constant dense<0.000000e+00> : vector<2x32xf32>
    %3 = tpu.matmul %0, %2, %cst {dimension_numbers = #tpu.dot_dimension_numbers<[1], [0], [0], [1], [0, 0, 1, 1], [], []>} : vector<2x32xf32>, vector<32x32xf32>, vector<2x32xf32> -> vector<2x32xf32>
    %c0_4 = arith.constant 0 : index
    %c0_5 = arith.constant 0 : index
    %c0_6 = arith.constant 0 : index
    %4 = vector.load %arg4[%c0_4, %c0_5, %c0_6] : memref<1x1x32xf32, #tpu.memory_space<vmem>>, vector<1x1x32xf32>
    %5 = vector.shape_cast %4 : vector<1x1x32xf32> to vector<1x32xf32>
    %6 = vector.broadcast %5 : vector<1x32xf32> to vector<2x32xf32>
    %7 = arith.addf %3, %6 : vector<2x32xf32>
    %c0_7 = arith.constant 0 : index
    %c0_8 = arith.constant 0 : index
    %c0_9 = arith.constant 0 : index
    %8 = vector.load %arg5[%c0_7, %c0_8, %c0_9] : memref<1x2x32xf32, #tpu.memory_space<vmem>>, vector<1x2x32xf32>
    %9 = vector.shape_cast %8 : vector<1x2x32xf32> to vector<2x32xf32>
    %10 = vector.shape_cast %7 : vector<2x32xf32> to vector<1x2x32xf32>
    tpu.vector_store %arg5[%c0_7, %c0_8, %c0_9], %10 {strides = array<i32>} : memref<1x2x32xf32, #tpu.memory_space<vmem>>, vector<1x2x32xf32>,
    return
  }
  func.func @transform_0(%arg0: i32, %arg1: i32) -> (i32, i32) {
    %c0_i32 = arith.constant 0 : i32
    %c0_i32_0 = arith.constant 0 : i32
    %c0_i32_1 = arith.constant 0 : i32
    return %c0_i32, %c0_i32_0 : i32, i32
  }
  func.func @transform_1(%arg0: i32, %arg1: i32) -> (i32, i32, i32) {
    %c1_i32 = arith.constant 1 : i32
    %0 = arith.muli %arg0, %c1_i32 : i32
    %1 = arith.addi %0, %arg1 : i32
    %c0_i32 = arith.constant 0 : i32
    %c0_i32_0 = arith.constant 0 : i32
    %c0_i32_1 = arith.constant 0 : i32
    return %1, %c0_i32, %c0_i32_0 : i32, i32, i32
  }
  func.func @transform_2(%arg0: i32, %arg1: i32) -> (i32, i32, i32) {
    %c0_i32 = arith.constant 0 : i32
    %c0_i32_0 = arith.constant 0 : i32
    return %arg0, %c0_i32, %arg1 : i32, i32, i32
  }
  func.func @transform_3(%arg0: i32, %arg1: i32) -> (i32, i32, i32) {
    %c0_i32 = arith.constant 0 : i32
    %c0_i32_0 = arith.constant 0 : i32
    return %arg0, %c0_i32, %arg1 : i32, i32, i32
  }
}

</mosaic_0001>

<llo_original>
// kernel: tpu_custom_call.1
$region0: #{tpu_custom_call.1}
  #allocation0 [shape = 'u32[]', space=smem, size = 0x4, offset = 0x4, fixed_abs, tag = 'smem constant byte address 0x4 - core index']
  #allocation1 [shape = 'u32[144,128]{1,0:T(1,128)}', space=vmem, size = 0x12000, scoped, tag = 'internal scratch']
  %s0 = inlined_call_operand.hbm [shape: f32[2,32], index: 0, kind: input, shape index: {}]
  %s1 = inlined_call_operand.hbm [shape: f32[6,32,32], index: 1, kind: input, shape index: {}]
  %s2 = inlined_call_operand.vmem [shape: f32[6,1,32], index: 2, kind: input, shape index: {}]
  %s3 = inlined_call_operand.hbm [shape: f32[6,2,32], index: 3, kind: output, shape index: {}]
  %s4 = sld [smem:[#allocation0]]
  $region53: #{tpu_custom_call.1} parent=0
    _
  %s6 = ssub.s32 1, %s4
  %s7 = scalar_select 0, %s6, %s4
  $region1: #{tpu_custom_call.1} parent=0
    #allocation2 [shape = 'u8[1024]{0}', space=vmem, size = 0x400, scoped, tag = 'input window, operand 0, single buffered']
    #allocation3 [shape = 's32[2]{0}', space=sflag, size = 0x8, scoped, tag = 'scoped memory for tpu_custom_call.1']
    #allocation4 [shape = 's32[2]{0}', space=sflag, size = 0x8, scoped, tag = 'scoped memory for tpu_custom_call.1']
    #allocation5 [shape = 'u8[32768]{0}', space=vmem, size = 0x8000, scoped, tag = 'input window, operand 1']
    #allocation6 [shape = 's32[2]{0}', space=sflag, size = 0x8, scoped, tag = 'scoped memory for tpu_custom_call.1']
    #allocation7 [shape = 'u8[2048]{0}', space=vmem, size = 0x800, scoped, tag = 'output window, operand 0']
    %8 = vsyncpa [#allocation3], 0
    %9 = vsyncpa [#allocation6], 0
    %s10 = scalar_lea.sflag [#allocation6], 1
    %11 = vsyncpa %s10, 0
    %12 = vsyncpa [#allocation4], 0
    %s13 = scalar_lea.sflag [#allocation4], 1
    %14 = vsyncpa %s13, 0
    loop: start=0, step=1, limit=8
    $region2: #{tpu_custom_call.1} parent=1 // loop_pre_header
      _
    $region3: #{tpu_custom_call.1} parent=1 // loop_header
      %s16 = sphi 0, %s20
      %p17 = scmp.ge.s32.totalorder %s16, 8
      %s23 = sphi 0, %s35
      %s24 = sphi 0, %s31
      %s25 = sphi 0, %s23
      %s26 = sphi 0, %s24
      %s27 = sphi 0, %s25
      %s28 = sphi 0, %s26
      %s36 = sphi 0, %s36
      %s38 = sphi 0, %s36
      %s39 = sphi 0, %s38
      %s53 = sphi 0, %s39
      %s61 = sphi 0, %s63
      %s64 = sphi 0, %s61
      %s65 = sphi 0, %s64
      %s81 = sphi 0, %s65
      %s89 = sphi 0, %s91
      %s92 = sphi 0, %s89
      %s93 = sphi 0, %s92
      %s109 = sphi 0, %s93
      %s117 = sphi 0, %s119
      %s120 = sphi 0, %s117
      %s121 = sphi 0, %s120
      %s137 = sphi 0, %s121
    $region4: #{tpu_custom_call.1} parent=1 // loop_header_branch
      %19 = sbr.rel (%p17) target = $region8
    $region5: #{tpu_custom_call.1} parent=1 // loop_body
      %s21 = ssub.s32 %s16, 1
      %s22 = ssub.s32 %s16, 2
      %s29 = sadd.s32 1, %s24
      %p30 = scmp.ge.s32.totalorder %s29, 1
      %s31 = scalar_select %p30, 0, %s29
      %s32 = sadd.s32 1, %s23
      %s33 = scalar_select %p30, %s32, %s23
      %p34 = scmp.ge.s32.totalorder %s33, 6
      %s35 = scalar_select %p34, 0, %s33
      %s37 = sadd.s32 %s36, 1
      %p40 = scmp.eq.s32.totalorder %s16, 5
      %p41 = scmp.ne.s32.totalorder %s36, %s38
      %p42 = scmp.eq.s32.totalorder %s16, 0
      %p43 = por %p41, %p42
      %p44 = scmp.ne.s32.totalorder %s36, %s38
      %p45 = scmp.eq.s32.totalorder %s21, 5
      %p46 = por %p44, %p45
      %p47 = scmp.ne.s32.totalorder %s38, %s39
      %p48 = scmp.eq.s32.totalorder %s21, 0
      %p49 = por %p47, %p48
      %p50 = scmp.ne.s32.totalorder %s38, %s39
      %p51 = scmp.eq.s32.totalorder %s22, 5
      %p52 = por %p50, %p51
      %p54 = scmp.ne.s32.totalorder %s39, %s53
      %p55 = scmp.eq.s32.totalorder %s22, 0
      %p56 = por %p54, %p55
      %s57 = sadd.s32 %s23, %s24
      %s58 = sadd.s32 %s35, %s31
      %s59 = ssub.s32 %s57, %s58
      %p60 = scmp.eq.s32.totalorder %s59, 0
      %s62 = sadd.s32 %s61, 1
      %s63 = scalar_select %p60, %s61, %s62
      %p66 = pneg %p60
      %p67 = scmp.eq.s32.totalorder %s16, 5
      %p68 = por %p66, %p67
      %p69 = scmp.ne.s32.totalorder %s61, %s64
      %p70 = scmp.eq.s32.totalorder %s16, 0
      %p71 = por %p69, %p70
      %p72 = scmp.ne.s32.totalorder %s61, %s64
      %p73 = scmp.eq.s32.totalorder %s21, 5
      %p74 = por %p72, %p73
      %p75 = scmp.ne.s32.totalorder %s64, %s65
      %p76 = scmp.eq.s32.totalorder %s21, 0
      %p77 = por %p75, %p76
      %p78 = scmp.ne.s32.totalorder %s64, %s65
      %p79 = scmp.eq.s32.totalorder %s22, 5
      %p80 = por %p78, %p79
      %p82 = scmp.ne.s32.totalorder %s65, %s81
      %p83 = scmp.eq.s32.totalorder %s22, 0
      %p84 = por %p82, %p83
      %s85 = ssub.s32 %s23, %s35
      %s86 = ssub.s32 %s24, %s31
      %s87 = sor.u32 %s85, %s86
      %p88 = scmp.eq.s32.totalorder %s87, 0
      %s90 = sadd.s32 %s89, 1
      %s91 = scalar_select %p88, %s89, %s90
      %p94 = pneg %p88
      %p95 = scmp.eq.s32.totalorder %s16, 5
      %p96 = por %p94, %p95
      %p97 = scmp.ne.s32.totalorder %s89, %s92
      %p98 = scmp.eq.s32.totalorder %s16, 0
      %p99 = por %p97, %p98
      %p100 = scmp.ne.s32.totalorder %s89, %s92
      %p101 = scmp.eq.s32.totalorder %s21, 5
      %p102 = por %p100, %p101
      %p103 = scmp.ne.s32.totalorder %s92, %s93
      %p104 = scmp.eq.s32.totalorder %s21, 0
      %p105 = por %p103, %p104
      %p106 = scmp.ne.s32.totalorder %s92, %s93
      %p107 = scmp.eq.s32.totalorder %s22, 5
      %p108 = por %p106, %p107
      %p110 = scmp.ne.s32.totalorder %s93, %s109
      %p111 = scmp.eq.s32.totalorder %s22, 0
      %p112 = por %p110, %p111
      %s113 = ssub.s32 %s23, %s35
      %s114 = ssub.s32 %s24, %s31
      %s115 = sor.u32 %s113, %s114
      %p116 = scmp.eq.s32.totalorder %s115, 0
      %s118 = sadd.s32 %s117, 1
      %s119 = scalar_select %p116, %s117, %s118
      %p122 = pneg %p116
      %p123 = scmp.eq.s32.totalorder %s16, 5
      %p124 = por %p122, %p123
      %p125 = scmp.ne.s32.totalorder %s117, %s120
      %p126 = scmp.eq.s32.totalorder %s16, 0
      %p127 = por %p125, %p126
      %p128 = scmp.ne.s32.totalorder %s117, %s120
      %p129 = scmp.eq.s32.totalorder %s21, 5
      %p130 = por %p128, %p129
      %p131 = scmp.ne.s32.totalorder %s120, %s121
      %p132 = scmp.eq.s32.totalorder %s21, 0
      %p133 = por %p131, %p132
      %p134 = scmp.ne.s32.totalorder %s120, %s121
      %p135 = scmp.eq.s32.totalorder %s22, 5
      %p136 = por %p134, %p135
      %p138 = scmp.ne.s32.totalorder %s121, %s137
      %p139 = scmp.eq.s32.totalorder %s22, 0
      %p140 = por %p138, %p139
      %p141 = scmp.le.s32.totalorder 1, %s16
      %p142 = scmp.lt.s32.totalorder %s16, 7
      %p143 = pnand %p141, %p142
      %p144 = pneg %p143
      // Predicated region
      $region9: #{tpu_custom_call.1} parent=5 // pred_check
        _
      $region10: #{tpu_custom_call.1} parent=5 // pred_check_branch
        %146 = sbr.rel (%p143) target = $region12
      $region11: #{tpu_custom_call.1} parent=5 // pred_region
        %s147 = ssub.s32 %s16, 1
        // Predicated region
        $region13: #{tpu_custom_call.1} parent=11 // pred_check
          %p148 = pneg %p49
        $region14: #{tpu_custom_call.1} parent=11 // pred_check_branch
          %150 = sbr.rel (%p148) target = $region16
        $region15: #{tpu_custom_call.1} parent=11 // pred_region
          %s152 = ssub.s32 32, 32
          %153 = vsyncadd [#allocation3], %s152
          %s155 = sshll.u32 [#allocation2], 4
          %s156 = int_to_ptr.vmem [resolvable:$true] %s155
          %158 = dma.hbm_to_vmem [thread:$0]  %s0, 32, %s156, [#allocation3]
        $region16: #{tpu_custom_call.1} parent=11 // pred_fallthru
          _
      $region12: #{tpu_custom_call.1} parent=5 // pred_fallthru
        _
      %p159 = scmp.lt.s32.totalorder %s16, 6
      // Predicated region
      $region17: #{tpu_custom_call.1} parent=5 // pred_check
        %p160 = pneg %p159
      $region18: #{tpu_custom_call.1} parent=5 // pred_check_branch
        %162 = sbr.rel (%p160) target = $region20
      $region19: #{tpu_custom_call.1} parent=5 // pred_region
        // Predicated region
        $region21: #{tpu_custom_call.1} parent=19 // pred_check
          %p163 = pneg %p71
        $region22: #{tpu_custom_call.1} parent=19 // pred_check_branch
          %165 = sbr.rel (%p163) target = $region24
        $region23: #{tpu_custom_call.1} parent=19 // pred_region
          %s166 = sand.u32 %s61, 1
          %s167 = scalar_lea.sflag [#allocation6], %s166
          %s168 = sand.u32 %s61, 1
          %s169 = smul.addr %s168, 32
          %s170 = scalar_lea.vmem [#allocation5], %s169
          %s171 = sadd.s32 %s23, %s24
          %s173 = ssub.s32 512, 512
          %174 = vsyncadd %s167, %s173
          %s175 = smul.addr %s171, 4
          %s176 = smul.addr %s175, 128
          %s177 = scalar_lea.hbm %s1, %s176
          %s178 = sshll.u32 %s170, 4
          %s179 = int_to_ptr.vmem [resolvable:$true] %s178
          %184 = dma.hbm_to_vmem [thread:$0]  %s177, 512, %s179, %s167, 128, 128, 8
        $region24: #{tpu_custom_call.1} parent=19 // pred_fallthru
          _
        // Predicated region
        $region25: #{tpu_custom_call.1} parent=19 // pred_check
          %p185 = pneg %p99
        $region26: #{tpu_custom_call.1} parent=19 // pred_check_branch
          %187 = sbr.rel (%p185) target = $region28
        $region27: #{tpu_custom_call.1} parent=19 // pred_region
          %p188 = scmp.lt.s32.totalorder %s23, 5
          %s189 = scalar_select %p188, %s23, 5
          %p190 = scmp.lt.s32.totalorder %s24, 0
          %s191 = scalar_select %p190, %s24, 0
          %s192 = sadd.s32 %s191, %s189
          %s193 = scalar_lea.vmem %s2, %s192
        $region28: #{tpu_custom_call.1} parent=19 // pred_fallthru
          _
      $region20: #{tpu_custom_call.1} parent=5 // pred_fallthru
        _
      %p194 = scmp.le.s32.totalorder 1, %s16
      %p195 = scmp.lt.s32.totalorder %s16, 7
      %p196 = pnand %p194, %p195
      %p197 = pneg %p196
      // Predicated region
      $region29: #{tpu_custom_call.1} parent=5 // pred_check
        _
      $region30: #{tpu_custom_call.1} parent=5 // pred_check_branch
        %199 = sbr.rel (%p196) target = $region32
      $region31: #{tpu_custom_call.1} parent=5 // pred_region
        %s200 = ssub.s32 %s16, 1
        // Predicated region
        $region33: #{tpu_custom_call.1} parent=31 // pred_check
          %p201 = pneg %p49
        $region34: #{tpu_custom_call.1} parent=31 // pred_check_branch
          %203 = sbr.rel (%p201) target = $region36
        $region35: #{tpu_custom_call.1} parent=31 // pred_region
          %204 = dma.done [#allocation3], 32
        $region36: #{tpu_custom_call.1} parent=31 // pred_fallthru
          _
        %s205 = sand.u32 %s64, 1
        %s206 = scalar_lea.sflag [#allocation6], %s205
        %s207 = sand.u32 %s64, 1
        %s208 = smul.addr %s207, 32
        %s209 = scalar_lea.vmem [#allocation5], %s208
        // Predicated region
        $region37: #{tpu_custom_call.1} parent=31 // pred_check
          %p210 = pneg %p77
        $region38: #{tpu_custom_call.1} parent=31 // pred_check_branch
          %212 = sbr.rel (%p210) target = $region40
        $region39: #{tpu_custom_call.1} parent=31 // pred_region
          %213 = dma.done %s206, 512
        $region40: #{tpu_custom_call.1} parent=31 // pred_fallthru
          _
        %p214 = pneg %p49
        %p215 = pneg %p46
        %s216 = sand.u32 %s64, 1
        %s217 = scalar_lea.sflag [#allocation6], %s216
        %s218 = sand.u32 %s64, 1
        %s219 = smul.addr %s218, 32
        %s220 = scalar_lea.vmem [#allocation5], %s219
        %p221 = pneg %p77
        %p222 = pneg %p74
        %p223 = scmp.lt.s32.totalorder %s25, 5
        %s224 = scalar_select %p223, %s25, 5
        %p225 = scmp.lt.s32.totalorder %s26, 0
        %s226 = scalar_select %p225, %s26, 0
        %s227 = sadd.s32 %s226, %s224
        %s228 = scalar_lea.vmem %s2, %s227
        %p229 = pneg %p105
        %p230 = pneg %p102
        %p231 = pneg %p133
        %p232 = pneg %p130
        %s233 = sand.u32 %s120, 1
        %s234 = scalar_lea.sflag [#allocation4], %s233
        %s235 = sand.u32 %s120, 1
        %s236 = smul.addr %s235, 2
        %s237 = scalar_lea.vmem [#allocation7], %s236
        %s238 = sadd.s32 %s25, %s26
        %p239 = scmp.lt.s32.totalorder %s25, 5
        %s240 = scalar_select %p239, %s25, 5
        %p241 = scmp.lt.s32.totalorder %s26, 0
        %s242 = scalar_select %p241, %s26, 0
        %s243 = sadd.s32 %s242, %s240
        %s244 = scalar_lea.vmem %s2, %s243
        %v245 = vld [vmem:[#allocation2] sm:$0x3]
        %v246 = vld [vmem:[%s209] sm:$0xff]
        %v247 = vld [vmem:[%s209 + $0x8] sm:$0xff]
        %v248 = vld [vmem:[%s209 + $0x10] sm:$0xff]
        %v249 = vld [vmem:[%s209 + $0x18] sm:$0xff]
        %v250 = vld [vmem:[%s244] sm:$0x1]
        %v252 = vlaneseq
        %v253 = vshrl.u32 %v252, 7
        %v254 = vsub.s32 0, %v253
        %v255 = vrot.slane %v250, %v254
        %vm257 = vcmask 261120
        %v259 = vsel %vm257, %v245, 0
        %261 = vmatprep.subr.mxu0 0.0
        %262 = vmatpush1.msra.mxu0 %v246
        %263 = vmatprep.subr.mxu0 0.0
        %264 = vmatpush1.msra.mxu0 %v247
        %265 = vmatprep.subr.mxu0 0.0
        %266 = vmatpush1.msra.mxu0 %v248
        %267 = vmatprep.subr.mxu0 0.0
        %268 = vmatpush1.msra.mxu0 %v249
        %269 = vmatprep.subr.mxu0 0.0
        %270 = vmatpush1.msra.mxu0 0.0
        %271 = vmatprep.subr.mxu0 0.0
        %272 = vmatpush1.msra.mxu0 0.0
        %273 = vmatprep.subr.mxu0 0.0
        %274 = vmatpush1.msra.mxu0 0.0
        %275 = vmatprep.subr.mxu0 0.0
        %276 = vmatpush1.msra.mxu0 0.0
        %277 = vmatprep.subr.mxu0 0.0
        %278 = vmatpush1.msra.mxu0 0.0
        %279 = vmatprep.subr.mxu0 0.0
        %280 = vmatpush1.msra.mxu0 0.0
        %281 = vmatprep.subr.mxu0 0.0
        %282 = vmatpush1.msra.mxu0 0.0
        %283 = vmatprep.subr.mxu0 0.0
        %284 = vmatpush1.msra.mxu0 0.0
        %285 = vmatprep.subr.mxu0 0.0
        %286 = vmatpush1.msra.mxu0 0.0
        %287 = vmatprep.subr.mxu0 0.0
        %288 = vmatpush1.msra.mxu0 0.0
        %289 = vmatprep.subr.mxu0 0.0
        %290 = vmatpush1.msra.mxu0 0.0
        %291 = vmatprep.subr.mxu0 0.0
        %292 = vmatpush1.msra.mxu0 0.0
        %293 = vmatprep.subr.mxu0 0.0
        %294 = vmatpush1.msra.mxu0 0.0
        %295 = vmatprep.subr.mxu0 0.0
        %296 = vmatpush1.msra.mxu0 0.0
        %297 = vmatprep.subr.mxu0 0.0
        %298 = vmatpush1.msra.mxu0 0.0
        %299 = vmatprep.subr.mxu0 0.0
        %300 = vmatpush1.msra.mxu0 0.0
        %301 = vmatprep.subr.mxu0 0.0
        %302 = vmatpush1.msra.mxu0 0.0
        %303 = vmatprep.subr.mxu0 0.0
        %304 = vmatpush1.msra.mxu0 0.0
        %305 = vmatprep.subr.mxu0 0.0
        %306 = vmatpush1.msra.mxu0 0.0
        %307 = vmatprep.subr.mxu0 0.0
        %308 = vmatpush1.msra.mxu0 0.0
        %309 = vmatprep.subr.mxu0 0.0
        %310 = vmatpush1.msra.mxu0 0.0
        %311 = vmatprep.subr.mxu0 0.0
        %312 = vmatpush1.msra.mxu0 0.0
        %313 = vmatprep.subr.mxu0 0.0
        %314 = vmatpush1.msra.mxu0 0.0
        %315 = vmatprep.subr.mxu0 0.0
        %316 = vmatpush1.msra.mxu0 0.0
        %317 = vmatprep.subr.mxu0 0.0
        %318 = vmatpush1.msra.mxu0 0.0
        %319 = vmatprep.subr.mxu0 0.0
        %320 = vmatpush1.msra.mxu0 0.0
        %321 = vmatprep.subr.mxu0 0.0
        %322 = vmatpush1.msra.mxu0 0.0
        %323 = vmatprep.subr.mxu0 0.0
        %324 = vmatpush1.msra.mxu0 0.0
        %325 = vmatprep.mubr.f32.mxu0 0.0
        %326 = vmatmul.mubr.f32.gmra.mrb[0].mxu0 %v259
        %v327 = vpop.f32.mrb[0].mxu0
        %v328 = vadd.f32 %v255, %v327
        %v329 = vpop.f32.mrb[0].mxu0
        %330 = vdwg.mxu0
        %vm331 = vcmask 254976
        %332 = vst.msk [vmem:[%s237] sm:$0x3] %vm331, %v328
        %s333 = sand.u32 %s120, 1
        %s334 = scalar_lea.sflag [#allocation4], %s333
        %s335 = sand.u32 %s120, 1
        %s336 = smul.addr %s335, 2
        %s337 = scalar_lea.vmem [#allocation7], %s336
        // Predicated region
        $region41: #{tpu_custom_call.1} parent=31 // pred_check
          %p338 = pneg %p130
        $region42: #{tpu_custom_call.1} parent=31 // pred_check_branch
          %340 = sbr.rel (%p338) target = $region44
        $region43: #{tpu_custom_call.1} parent=31 // pred_region
          %s342 = ssub.s32 32, 32
          %343 = vsyncadd %s334, %s342
          %s344 = sadd.s32 %s26, %s25
          %s345 = smul.addr %s344, 32
          %s346 = scalar_lea.hbm %s3, %s345
          %s348 = sshll.u32 %s337, 4
          %s349 = int_to_ptr.vmem [resolvable:$true] %s348
          %351 = dma.vmem_to_hbm [thread:$0]  %s349, 32, %s346, %s334
        $region44: #{tpu_custom_call.1} parent=31 // pred_fallthru
          _
      $region32: #{tpu_custom_call.1} parent=5 // pred_fallthru
        _
      %p352 = scmp.le.s32.totalorder 2, %s16
      // Predicated region
      $region45: #{tpu_custom_call.1} parent=5 // pred_check
        %p353 = pneg %p352
      $region46: #{tpu_custom_call.1} parent=5 // pred_check_branch
        %355 = sbr.rel (%p353) target = $region48
      $region47: #{tpu_custom_call.1} parent=5 // pred_region
        %s356 = ssub.s32 %s16, 2
        // Predicated region
        $region49: #{tpu_custom_call.1} parent=47 // pred_check
          %p357 = pneg %p136
        $region50: #{tpu_custom_call.1} parent=47 // pred_check_branch
          %359 = sbr.rel (%p357) target = $region52
        $region51: #{tpu_custom_call.1} parent=47 // pred_region
          %s360 = sand.u32 %s121, 1
          %s361 = scalar_lea.sflag [#allocation4], %s360
          %s362 = sand.u32 %s121, 1
          %s363 = smul.addr %s362, 2
          %s364 = scalar_lea.vmem [#allocation7], %s363
          %365 = dma.done %s361, 32
        $region52: #{tpu_custom_call.1} parent=47 // pred_fallthru
          _
      $region48: #{tpu_custom_call.1} parent=5 // pred_fallthru
        _
    $region6: #{tpu_custom_call.1} parent=1 // loop_footer
      %s20 = sadd.s32 1, %s16
    $region7: #{tpu_custom_call.1} parent=1 // loop_footer_branch
      %15 = sbr.rel target = $region3
    $region8: #{tpu_custom_call.1} parent=1 // loop_exit
      _
    %366 = vsyncpa [#allocation3], 1
    %s367 = scalar_lea.sflag [#allocation3], 1
    %368 = vsyncpa %s367, 1
    %369 = vsyncpa [#allocation6], 1
    %s370 = scalar_lea.sflag [#allocation6], 1
    %371 = vsyncpa %s370, 1
    %372 = vsyncpa [#allocation4], 1
    %s373 = scalar_lea.sflag [#allocation4], 1
    %374 = vsyncpa %s373, 1

</llo_original>
